<compile_context>
chip_gen: v6e
topology: v6e:2x2x1
jax: 0.10.0
libtpu: 0.0.40
codegen_flags: <defaults>
</compile_context>

<pallas_src>
import jax
import jax.numpy as jnp
from jax import lax
from jax.experimental import pallas as pl
from jax.experimental.pallas import tpu as pltpu

_LANE = 128
_MAX_TILE_ROWS = 2048   # (2048, 128) f32 block = 1 MiB per array


def _bern_mask_kernel(seed_ref, x_ref, p_ref, masked_ref, inv_ref):
    """One (tile_rows, 128) tile: sample hard Bernoulli mask on-chip, apply to x."""
    rows, lanes = x_ref.shape  # static block shape

    # Global element index, unique across the whole slab (per grid step).
    base = pl.program_id(0) * (rows * lanes)
    row = lax.broadcasted_iota(jnp.int32, (rows, lanes), 0)
    col = lax.broadcasted_iota(jnp.int32, (rows, lanes), 1)
    idx = (base + row * lanes + col).astype(jnp.uint32)

    # Counter-based PRNG: hash (seed, idx) with the lowbias32 mixer.
    # Pure VPU integer ops; not bit-exact with torch's uniform_ (statistically
    # equivalent Bernoulli(p) sampling).
    seed = seed_ref[0].astype(jnp.uint32)
    h = idx ^ (seed * jnp.uint32(0x9E3779B9))
    h = (h ^ (h >> 16)) * jnp.uint32(0x7FEB352D)
    h = (h ^ (h >> 15)) * jnp.uint32(0x846CA68B)
    h = h ^ (h >> 16)
    # Top 24 bits -> uniform in [0, 1).
    u = (h >> 8).astype(jnp.float32) * jnp.float32(1.0 / (1 << 24))

    p = p_ref[...].astype(jnp.float32)
    # hard = round(sigmoid(gumbel-sigmoid logit / temp)) == [u > 1 - p]
    hard = jnp.where(u > 1.0 - p, jnp.float32(1.0), jnp.float32(0.0))

    # x * hard (not where(cond, x, 0)) so NaN/Inf in masked-out x propagate,
    # matching PyTorch.
    masked_ref[...] = (x_ref[...].astype(jnp.float32) * hard).astype(masked_ref.dtype)
    inv_ref[...] = (1.0 - hard).astype(inv_ref.dtype)


def bern_mask_forward(x, mask_probs, key, temp=0.1):
    """JAX/Pallas equivalent of bern_mask.forward(x).

    x:          float array, any shape (e.g. NCHW [N, C, H, W])
    mask_probs: float array, same shape as x (the nn.Parameter)
    key:        PRNG key for the Bernoulli noise
    temp:       temperature; any temp > 0 gives the same hard forward value.
    Returns (x * hard_mask, 1 - hard_mask), both with x.shape.
    """
    assert x.shape == mask_probs.shape
    del temp  # forward hard-mask value is temperature-independent for temp > 0
    orig_shape = x.shape
    n = x.size
    masked_dtype = jnp.promote_types(x.dtype, mask_probs.dtype)
    inv_dtype = mask_probs.dtype

    # Flatten to a lane-dense [rows, 128] slab in the caller's dtype; pad (and
    # therefore copy) only when n is not already a multiple of 128.
    xf = x.reshape(-1)
    pf = mask_probs.reshape(-1)
    pad = (-n) % _LANE
    if pad:
        xf = jnp.pad(xf, (0, pad))
        pf = jnp.pad(pf, (0, pad))
    rows = (n + pad) // _LANE
    x2 = xf.reshape(rows, _LANE)
    p2 = pf.reshape(rows, _LANE)

    # Block sublane alignment: (8,128) for 4-byte, (16,128) for 2-byte,
    # (32,128) for 1-byte dtypes.
    itemsize = min(jnp.dtype(x.dtype).itemsize, jnp.dtype(mask_probs.dtype).itemsize)
    row_align = max(8, 32 // max(itemsize, 1))

    # Aim for >= ~4 grid steps (megacore sharding on v7x + DMA/compute overlap
    # on all gens), capped by VMEM budget.
    target = pl.cdiv(pl.cdiv(rows, 4), row_align) * row_align
    tile_rows = min(_MAX_TILE_ROWS, target)
    if tile_rows >= rows:
        tile_rows = rows  # single full-extent block (always layout-legal)
    grid = (pl.cdiv(rows, tile_rows),)

    spec = pl.BlockSpec((tile_rows, _LANE), lambda i, seed: (i, 0))

    # int32 seed for the in-kernel hash PRNG, derived from the JAX key.
    seed = jax.random.randint(key, (1,), 0, jnp.iinfo(jnp.int32).max,
                              dtype=jnp.int32)

    masked2, inv2 = pl.pallas_call(
        _bern_mask_kernel,
        out_shape=(
            jax.ShapeDtypeStruct((rows, _LANE), masked_dtype),
            jax.ShapeDtypeStruct((rows, _LANE), inv_dtype),
        ),
        grid_spec=pltpu.PrefetchScalarGridSpec(
            num_scalar_prefetch=1,
            grid=grid,
            in_specs=[spec, spec],
            out_specs=[spec, spec],
        ),
        compiler_params=pltpu.CompilerParams(
            dimension_semantics=("parallel",)),
    )(seed, x2, p2)

    def _from_slab(s):
        flat = s.reshape(-1)
        if pad:
            flat = flat[:n]
        return flat.reshape(orig_shape)

    return _from_slab(masked2), _from_slab(inv2)


if __name__ == "__main__":
    key = jax.random.PRNGKey(0)
    k_x, k_u = jax.random.split(key)

    # small NCHW input, as the module would mask an image tensor
    N, C, H, W = 2, 4, 16, 16
    x = jax.random.normal(k_x, (N, C, H, W), dtype=jnp.float32)

    # nn.Parameter(torch.ones(shape) * init_p), init_p = 0.5
    init_p = 0.5
    mask_probs = jnp.full((N, C, H, W), init_p, dtype=jnp.float32)

    masked_x, inv_mask = bern_mask_forward(x, mask_probs, k_u, temp=0.1)
    jax.block_until_ready((masked_x, inv_mask))

    # sanity: mask is binary {0,1}, inv = 1 - mask, masked = x * mask
    hard = 1.0 - inv_mask
    assert bool(jnp.all((hard == 0.0) | (hard == 1.0)))
    assert bool(jnp.allclose(masked_x, x * hard))
    # with p = 0.5 the hard mask should be ~Bernoulli(0.5)
    frac = float(jnp.mean(hard))
    assert 0.3 < frac < 0.7, frac

    print("KERNEL_OK")
</pallas_src>

<mosaic_0001>
module attributes {stable_mosaic.version = 11 : i64} {
  func.func @_bern_mask_kernel(%arg0: i32, %arg1: memref<1xi32, #tpu.memory_space<smem>>, %arg2: memref<8x128xf32, #tpu.memory_space<vmem>>, %arg3: memref<8x128xf32, #tpu.memory_space<vmem>>, %arg4: memref<8x128xf32, #tpu.memory_space<vmem>>, %arg5: memref<8x128xf32, #tpu.memory_space<vmem>>) attributes {dimension_semantics = [#tpu.dimension_semantics<parallel>], iteration_bounds = array<i64: 2>, scalar_prefetch = 1 : i64, scratch_operands = 0 : i64, tpu.core_type = #tpu.core_type<tc>, window_params = [{transform_indices = @transform_0, window_bounds = array<i64: 8, 128>}, {transform_indices = @transform_1, window_bounds = array<i64: 8, 128>}, {transform_indices = @transform_2, window_bounds = array<i64: 8, 128>}, {transform_indices = @transform_3, window_bounds = array<i64: 8, 128>}]} {
    %c1024_i32 = arith.constant 1024 : i32
    %0 = arith.muli %arg0, %c1024_i32 : i32
    %1 = tpu.iota {dimensions = array<i32: 0>} : vector<8x128xi32>
    %2 = tpu.iota {dimensions = array<i32: 1>} : vector<8x128xi32>
    %c128_i32 = arith.constant 128 : i32
    %3 = vector.broadcast %c128_i32 : i32 to vector<8x128xi32>
    %4 = arith.muli %1, %3 : vector<8x128xi32>
    %5 = vector.broadcast %0 : i32 to vector<8x128xi32>
    %6 = arith.addi %5, %4 : vector<8x128xi32>
    %7 = arith.addi %6, %2 : vector<8x128xi32>
    %c0 = arith.constant 0 : index
    %8 = memref.load %arg1[%c0] : memref<1xi32, #tpu.memory_space<smem>>
    %c-1640531527_i32 = arith.constant -1640531527 : i32
    %9 = arith.muli %8, %c-1640531527_i32 : i32
    %10 = vector.broadcast %9 : i32 to vector<8x128xi32>
    %11 = arith.xori %7, %10 : vector<8x128xi32>
    %c16_i32 = arith.constant 16 : i32
    %12 = vector.broadcast %c16_i32 : i32 to vector<8x128xi32>
    %13 = arith.shrui %11, %12 : vector<8x128xi32>
    %14 = arith.xori %11, %13 : vector<8x128xi32>
    %c2146121005_i32 = arith.constant 2146121005 : i32
    %15 = vector.broadcast %c2146121005_i32 : i32 to vector<8x128xi32>
    %16 = arith.muli %14, %15 : vector<8x128xi32>
    %c15_i32 = arith.constant 15 : i32
    %17 = vector.broadcast %c15_i32 : i32 to vector<8x128xi32>
    %18 = arith.shrui %16, %17 : vector<8x128xi32>
    %19 = arith.xori %16, %18 : vector<8x128xi32>
    %c-2073254261_i32 = arith.constant -2073254261 : i32
    %20 = vector.broadcast %c-2073254261_i32 : i32 to vector<8x128xi32>
    %21 = arith.muli %19, %20 : vector<8x128xi32>
    %c16_i32_0 = arith.constant 16 : i32
    %22 = vector.broadcast %c16_i32_0 : i32 to vector<8x128xi32>
    %23 = arith.shrui %21, %22 : vector<8x128xi32>
    %24 = arith.xori %21, %23 : vector<8x128xi32>
    %c8_i32 = arith.constant 8 : i32
    %25 = vector.broadcast %c8_i32 : i32 to vector<8x128xi32>
    %26 = arith.shrui %24, %25 : vector<8x128xi32>
    %27 = arith.uitofp %26 : vector<8x128xi32> to vector<8x128xf32>
    %cst = arith.constant 5.96046448E-8 : f32
    %28 = vector.broadcast %cst : f32 to vector<8x128xf32>
    %29 = arith.mulf %27, %28 : vector<8x128xf32>
    %c0_1 = arith.constant 0 : index
    %c0_2 = arith.constant 0 : index
    %30 = vector.load %arg3[%c0_1, %c0_2] : memref<8x128xf32, #tpu.memory_space<vmem>>, vector<8x128xf32>
    %cst_3 = arith.constant 1.000000e+00 : f32
    %31 = vector.broadcast %cst_3 : f32 to vector<8x128xf32>
    %32 = arith.subf %31, %30 : vector<8x128xf32>
    %33 = arith.cmpf ogt, %29, %32 : vector<8x128xf32>
    %cst_4 = arith.constant 1.000000e+00 : f32
    %cst_5 = arith.constant 0.000000e+00 : f32
    %34 = vector.broadcast %cst_4 : f32 to vector<8x128xf32>
    %35 = vector.broadcast %cst_5 : f32 to vector<8x128xf32>
    %36 = arith.select %33, %34, %35 : vector<8x128xi1>, vector<8x128xf32>
    %c0_6 = arith.constant 0 : index
    %c0_7 = arith.constant 0 : index
    %37 = vector.load %arg2[%c0_6, %c0_7] : memref<8x128xf32, #tpu.memory_space<vmem>>, vector<8x128xf32>
    %38 = arith.mulf %37, %36 : vector<8x128xf32>
    %c0_8 = arith.constant 0 : index
    %c0_9 = arith.constant 0 : index
    %39 = vector.load %arg4[%c0_8, %c0_9] : memref<8x128xf32, #tpu.memory_space<vmem>>, vector<8x128xf32>
    tpu.vector_store %arg4[%c0_8, %c0_9], %38 {strides = array<i32>} : memref<8x128xf32, #tpu.memory_space<vmem>>, vector<8x128xf32>,
    %cst_10 = arith.constant 1.000000e+00 : f32
    %40 = vector.broadcast %cst_10 : f32 to vector<8x128xf32>
    %41 = arith.subf %40, %36 : vector<8x128xf32>
    %c0_11 = arith.constant 0 : index
    %c0_12 = arith.constant 0 : index
    %42 = vector.load %arg5[%c0_11, %c0_12] : memref<8x128xf32, #tpu.memory_space<vmem>>, vector<8x128xf32>
    tpu.vector_store %arg5[%c0_11, %c0_12], %41 {strides = array<i32>} : memref<8x128xf32, #tpu.memory_space<vmem>>, vector<8x128xf32>,
    return
  }
  func.func @transform_0(%arg0: i32, %arg1: memref<1xi32, #tpu.memory_space<smem>>) -> (i32, i32) {
    %c0_i32 = arith.constant 0 : i32
    %c0_i32_0 = arith.constant 0 : i32
    return %arg0, %c0_i32 : i32, i32
  }
  func.func @transform_1(%arg0: i32, %arg1: memref<1xi32, #tpu.memory_space<smem>>) -> (i32, i32) {
    %c0_i32 = arith.constant 0 : i32
    %c0_i32_0 = arith.constant 0 : i32
    return %arg0, %c0_i32 : i32, i32
  }
  func.func @transform_2(%arg0: i32, %arg1: memref<1xi32, #tpu.memory_space<smem>>) -> (i32, i32) {
    %c0_i32 = arith.constant 0 : i32
    %c0_i32_0 = arith.constant 0 : i32
    return %arg0, %c0_i32 : i32, i32
  }
  func.func @transform_3(%arg0: i32, %arg1: memref<1xi32, #tpu.memory_space<smem>>) -> (i32, i32) {
    %c0_i32 = arith.constant 0 : i32
    %c0_i32_0 = arith.constant 0 : i32
    return %arg0, %c0_i32 : i32, i32
  }
}

</mosaic_0001>

<llo_original>
// kernel: tpu_custom_call.1
$region0: #{tpu_custom_call.1}
  #allocation0 [shape = 'u32[]', space=smem, size = 0x4, offset = 0x4, fixed_abs, tag = 'smem constant byte address 0x4 - core index']
  #allocation1 [shape = 'u32[144,128]{1,0:T(1,128)}', space=vmem, size = 0x12000, scoped, tag = 'internal scratch']
  #allocation2 [shape = 's32[1]{0}', space=sflag, size = 0x4, scoped, tag = 'scoped memory for tpu_custom_call.1']
  #allocation3 [shape = 's32[1]{0:T(128)S(6)}', space=smem, size = 0x200, scoped, tag = 'prefetched SMEM operand 0']
  %s0 = inlined_call_operand.<no memory space> [shape: s32[1], index: 0, kind: input, shape index: {}]
  %s1 = inlined_call_operand.hbm [shape: f32[16,128], index: 1, kind: input, shape index: {}]
  %s2 = inlined_call_operand.hbm [shape: f32[16,128], index: 2, kind: input, shape index: {}]
  %s3 = inlined_call_operand.hbm [shape: f32[16,128], index: 3, kind: output, shape index: {0}]
  %s4 = inlined_call_operand.hbm [shape: f32[16,128], index: 4, kind: output, shape index: {1}]
  %5 = xla_tuple %s3, %s4
  %s6 = sld [smem:[#allocation0]]
  $region57: #{tpu_custom_call.1} parent=0
    _
  %s8 = ssub.s32 1, %s6
  %s9 = scalar_select 0, %s8, %s6
  %10 = sst [smem:[#allocation3]] %s0
  $region1: #{tpu_custom_call.1} parent=0
    #allocation4 [shape = 'u8[8192]{0}', space=vmem, size = 0x2000, scoped, tag = 'input window, operand 1']
    #allocation5 [shape = 's32[2]{0}', space=sflag, size = 0x8, scoped, tag = 'scoped memory for tpu_custom_call.1']
    #allocation6 [shape = 's32[2]{0}', space=sflag, size = 0x8, scoped, tag = 'scoped memory for tpu_custom_call.1']
    #allocation7 [shape = 'u8[8192]{0}', space=vmem, size = 0x2000, scoped, tag = 'input window, operand 2']
    #allocation8 [shape = 's32[2]{0}', space=sflag, size = 0x8, scoped, tag = 'scoped memory for tpu_custom_call.1']
    #allocation9 [shape = 'u8[8192]{0}', space=vmem, size = 0x2000, scoped, tag = 'output window, operand 0']
    #allocation10 [shape = 'u8[8192]{0}', space=vmem, size = 0x2000, scoped, tag = 'output window, operand 1']
    #allocation11 [shape = 's32[2]{0}', space=sflag, size = 0x8, scoped, tag = 'scoped memory for tpu_custom_call.1']
    %11 = vsyncpa [#allocation5], 0
    %s12 = scalar_lea.sflag [#allocation5], 1
    %13 = vsyncpa %s12, 0
    %14 = vsyncpa [#allocation8], 0
    %s15 = scalar_lea.sflag [#allocation8], 1
    %16 = vsyncpa %s15, 0
    %17 = vsyncpa [#allocation6], 0
    %s18 = scalar_lea.sflag [#allocation6], 1
    %19 = vsyncpa %s18, 0
    %20 = vsyncpa [#allocation11], 0
    %s21 = scalar_lea.sflag [#allocation11], 1
    %22 = vsyncpa %s21, 0
    loop: start=0, step=1, limit=4
    $region2: #{tpu_custom_call.1} parent=1 // loop_pre_header
      _
    $region3: #{tpu_custom_call.1} parent=1 // loop_header
      %s24 = sphi 0, %s28
      %p25 = scmp.ge.s32.totalorder %s24, 4
      %s34 = sphi 0, %s36
      %s37 = sphi 0, %s34
      %s38 = sphi 0, %s37
      %s54 = sphi 0, %s38
      %s60 = sphi 0, %s62
      %s63 = sphi 0, %s60
      %s64 = sphi 0, %s63
      %s80 = sphi 0, %s64
      %s86 = sphi 0, %s88
      %s89 = sphi 0, %s86
      %s90 = sphi 0, %s89
      %s106 = sphi 0, %s90
      %s112 = sphi 0, %s114
      %s115 = sphi 0, %s112
      %s116 = sphi 0, %s115
      %s132 = sphi 0, %s116
    $region4: #{tpu_custom_call.1} parent=1 // loop_header_branch
      %27 = sbr.rel (%p25) target = $region8
    $region5: #{tpu_custom_call.1} parent=1 // loop_body
      %s29 = ssub.s32 %s24, 1
      %s30 = ssub.s32 %s24, 2
      %s31 = sadd.s32 %s24, 1
      %s32 = ssub.s32 %s24, %s31
      %p33 = scmp.eq.s32.totalorder %s32, 0
      %s35 = sadd.s32 %s34, 1
      %s36 = scalar_select %p33, %s34, %s35
      %p39 = pneg %p33
      %p40 = scmp.eq.s32.totalorder %s24, 1
      %p41 = por %p39, %p40
      %p42 = scmp.ne.s32.totalorder %s34, %s37
      %p43 = scmp.eq.s32.totalorder %s24, 0
      %p44 = por %p42, %p43
      %p45 = scmp.ne.s32.totalorder %s34, %s37
      %p46 = scmp.eq.s32.totalorder %s29, 1
      %p47 = por %p45, %p46
      %p48 = scmp.ne.s32.totalorder %s37, %s38
      %p49 = scmp.eq.s32.totalorder %s29, 0
      %p50 = por %p48, %p49
      %p51 = scmp.ne.s32.totalorder %s37, %s38
      %p52 = scmp.eq.s32.totalorder %s30, 1
      %p53 = por %p51, %p52
      %p55 = scmp.ne.s32.totalorder %s38, %s54
      %p56 = scmp.eq.s32.totalorder %s30, 0
      %p57 = por %p55, %p56
      %s58 = ssub.s32 %s24, %s31
      %p59 = scmp.eq.s32.totalorder %s58, 0
      %s61 = sadd.s32 %s60, 1
      %s62 = scalar_select %p59, %s60, %s61
      %p65 = pneg %p59
      %p66 = scmp.eq.s32.totalorder %s24, 1
      %p67 = por %p65, %p66
      %p68 = scmp.ne.s32.totalorder %s60, %s63
      %p69 = scmp.eq.s32.totalorder %s24, 0
      %p70 = por %p68, %p69
      %p71 = scmp.ne.s32.totalorder %s60, %s63
      %p72 = scmp.eq.s32.totalorder %s29, 1
      %p73 = por %p71, %p72
      %p74 = scmp.ne.s32.totalorder %s63, %s64
      %p75 = scmp.eq.s32.totalorder %s29, 0
      %p76 = por %p74, %p75
      %p77 = scmp.ne.s32.totalorder %s63, %s64
      %p78 = scmp.eq.s32.totalorder %s30, 1
      %p79 = por %p77, %p78
      %p81 = scmp.ne.s32.totalorder %s64, %s80
      %p82 = scmp.eq.s32.totalorder %s30, 0
      %p83 = por %p81, %p82
      %s84 = ssub.s32 %s24, %s31
      %p85 = scmp.eq.s32.totalorder %s84, 0
      %s87 = sadd.s32 %s86, 1
      %s88 = scalar_select %p85, %s86, %s87
      %p91 = pneg %p85
      %p92 = scmp.eq.s32.totalorder %s24, 1
      %p93 = por %p91, %p92
      %p94 = scmp.ne.s32.totalorder %s86, %s89
      %p95 = scmp.eq.s32.totalorder %s24, 0
      %p96 = por %p94, %p95
      %p97 = scmp.ne.s32.totalorder %s86, %s89
      %p98 = scmp.eq.s32.totalorder %s29, 1
      %p99 = por %p97, %p98
      %p100 = scmp.ne.s32.totalorder %s89, %s90
      %p101 = scmp.eq.s32.totalorder %s29, 0
      %p102 = por %p100, %p101
      %p103 = scmp.ne.s32.totalorder %s89, %s90
      %p104 = scmp.eq.s32.totalorder %s30, 1
      %p105 = por %p103, %p104
      %p107 = scmp.ne.s32.totalorder %s90, %s106
      %p108 = scmp.eq.s32.totalorder %s30, 0
      %p109 = por %p107, %p108
      %s110 = ssub.s32 %s24, %s31
      %p111 = scmp.eq.s32.totalorder %s110, 0
      %s113 = sadd.s32 %s112, 1
      %s114 = scalar_select %p111, %s112, %s113
      %p117 = pneg %p111
      %p118 = scmp.eq.s32.totalorder %s24, 1
      %p119 = por %p117, %p118
      %p120 = scmp.ne.s32.totalorder %s112, %s115
      %p121 = scmp.eq.s32.totalorder %s24, 0
      %p122 = por %p120, %p121
      %p123 = scmp.ne.s32.totalorder %s112, %s115
      %p124 = scmp.eq.s32.totalorder %s29, 1
      %p125 = por %p123, %p124
      %p126 = scmp.ne.s32.totalorder %s115, %s116
      %p127 = scmp.eq.s32.totalorder %s29, 0
      %p128 = por %p126, %p127
      %p129 = scmp.ne.s32.totalorder %s115, %s116
      %p130 = scmp.eq.s32.totalorder %s30, 1
      %p131 = por %p129, %p130
      %p133 = scmp.ne.s32.totalorder %s116, %s132
      %p134 = scmp.eq.s32.totalorder %s30, 0
      %p135 = por %p133, %p134
      %p136 = scmp.le.s32.totalorder 1, %s24
      %p137 = scmp.lt.s32.totalorder %s24, 3
      %p138 = pnand %p136, %p137
      %p139 = pneg %p138
      // Predicated region
      $region9: #{tpu_custom_call.1} parent=5 // pred_check
        _
      $region10: #{tpu_custom_call.1} parent=5 // pred_check_branch
        %141 = sbr.rel (%p138) target = $region12
      $region11: #{tpu_custom_call.1} parent=5 // pred_region
        %s142 = ssub.s32 %s24, 1
      $region12: #{tpu_custom_call.1} parent=5 // pred_fallthru
        _
      %p143 = scmp.lt.s32.totalorder %s24, 2
      // Predicated region
      $region13: #{tpu_custom_call.1} parent=5 // pred_check
        %p144 = pneg %p143
      $region14: #{tpu_custom_call.1} parent=5 // pred_check_branch
        %146 = sbr.rel (%p144) target = $region16
      $region15: #{tpu_custom_call.1} parent=5 // pred_region
        // Predicated region
        $region17: #{tpu_custom_call.1} parent=15 // pred_check
          %p147 = pneg %p44
        $region18: #{tpu_custom_call.1} parent=15 // pred_check_branch
          %149 = sbr.rel (%p147) target = $region20
        $region19: #{tpu_custom_call.1} parent=15 // pred_region
          %s150 = sand.u32 %s34, 1
          %s151 = scalar_lea.sflag [#allocation5], %s150
          %s152 = sand.u32 %s34, 1
          %s153 = smul.addr %s152, 8
          %s154 = scalar_lea.vmem [#allocation4], %s153
          %s156 = ssub.s32 128, 128
          %157 = vsyncadd %s151, %s156
          %s158 = smul.addr %s24, 128
          %s159 = scalar_lea.hbm %s1, %s158
          %s161 = sshll.u32 %s154, 4
          %s162 = int_to_ptr.vmem [resolvable:$true] %s161
          %164 = dma.hbm_to_vmem [thread:$0]  %s159, 128, %s162, %s151
        $region20: #{tpu_custom_call.1} parent=15 // pred_fallthru
          _
        // Predicated region
        $region21: #{tpu_custom_call.1} parent=15 // pred_check
          %p165 = pneg %p70
        $region22: #{tpu_custom_call.1} parent=15 // pred_check_branch
          %167 = sbr.rel (%p165) target = $region24
        $region23: #{tpu_custom_call.1} parent=15 // pred_region
          %s168 = sand.u32 %s60, 1
          %s169 = scalar_lea.sflag [#allocation8], %s168
          %s170 = sand.u32 %s60, 1
          %s171 = smul.addr %s170, 8
          %s172 = scalar_lea.vmem [#allocation7], %s171
          %s174 = ssub.s32 128, 128
          %175 = vsyncadd %s169, %s174
          %s176 = smul.addr %s24, 128
          %s177 = scalar_lea.hbm %s2, %s176
          %s179 = sshll.u32 %s172, 4
          %s180 = int_to_ptr.vmem [resolvable:$true] %s179
          %182 = dma.hbm_to_vmem [thread:$0]  %s177, 128, %s180, %s169
        $region24: #{tpu_custom_call.1} parent=15 // pred_fallthru
          _
      $region16: #{tpu_custom_call.1} parent=5 // pred_fallthru
        _
      %p183 = scmp.le.s32.totalorder 1, %s24
      %p184 = scmp.lt.s32.totalorder %s24, 3
      %p185 = pnand %p183, %p184
      %p186 = pneg %p185
      // Predicated region
      $region25: #{tpu_custom_call.1} parent=5 // pred_check
        _
      $region26: #{tpu_custom_call.1} parent=5 // pred_check_branch
        %188 = sbr.rel (%p185) target = $region28
      $region27: #{tpu_custom_call.1} parent=5 // pred_region
        %s189 = ssub.s32 %s24, 1
        %s190 = sand.u32 %s37, 1
        %s191 = scalar_lea.sflag [#allocation5], %s190
        %s192 = sand.u32 %s37, 1
        %s193 = smul.addr %s192, 8
        %s194 = scalar_lea.vmem [#allocation4], %s193
        // Predicated region
        $region29: #{tpu_custom_call.1} parent=27 // pred_check
          %p195 = pneg %p50
        $region30: #{tpu_custom_call.1} parent=27 // pred_check_branch
          %197 = sbr.rel (%p195) target = $region32
        $region31: #{tpu_custom_call.1} parent=27 // pred_region
          %198 = dma.done %s191, 128
        $region32: #{tpu_custom_call.1} parent=27 // pred_fallthru
          _
        %s199 = sand.u32 %s63, 1
        %s200 = scalar_lea.sflag [#allocation8], %s199
        %s201 = sand.u32 %s63, 1
        %s202 = smul.addr %s201, 8
        %s203 = scalar_lea.vmem [#allocation7], %s202
        // Predicated region
        $region33: #{tpu_custom_call.1} parent=27 // pred_check
          %p204 = pneg %p76
        $region34: #{tpu_custom_call.1} parent=27 // pred_check_branch
          %206 = sbr.rel (%p204) target = $region36
        $region35: #{tpu_custom_call.1} parent=27 // pred_region
          %207 = dma.done %s200, 128
        $region36: #{tpu_custom_call.1} parent=27 // pred_fallthru
          _
        %s208 = sand.u32 %s37, 1
        %s209 = scalar_lea.sflag [#allocation5], %s208
        %s210 = sand.u32 %s37, 1
        %s211 = smul.addr %s210, 8
        %s212 = scalar_lea.vmem [#allocation4], %s211
        %p213 = pneg %p50
        %p214 = pneg %p47
        %s215 = sand.u32 %s63, 1
        %s216 = scalar_lea.sflag [#allocation8], %s215
        %s217 = sand.u32 %s63, 1
        %s218 = smul.addr %s217, 8
        %s219 = scalar_lea.vmem [#allocation7], %s218
        %p220 = pneg %p76
        %p221 = pneg %p73
        %p222 = pneg %p102
        %p223 = pneg %p99
        %s224 = sand.u32 %s89, 1
        %s225 = scalar_lea.sflag [#allocation6], %s224
        %s226 = sand.u32 %s89, 1
        %s227 = smul.addr %s226, 8
        %s228 = scalar_lea.vmem [#allocation9], %s227
        %p229 = pneg %p128
        %p230 = pneg %p125
        %s231 = sand.u32 %s115, 1
        %s232 = scalar_lea.sflag [#allocation11], %s231
        %s233 = sand.u32 %s115, 1
        %s234 = smul.addr %s233, 8
        %s235 = scalar_lea.vmem [#allocation10], %s234
        %s236 = smul.u32 %s29, 1024
        %v237 = vlaneseq
        %v238 = vshrl.u32 %v237, 7
        %v239 = vlaneseq
        %v240 = vand.u32 %v239, 127
        %v241 = vmul.u32 %v238, 128
        %v242 = vstv %s236
        %v243 = vadd.s32 %v242, %v241
        %v244 = vadd.s32 %v243, %v240
        %s245 = sld [smem:[#allocation3]]
        %s246 = smul.u32 %s245, 2654435769
        %v247 = vstv %s246
        %v248 = vxor.u32 %v244, %v247
        %v249 = vshrl.u32 %v248, 16
        %v250 = vxor.u32 %v248, %v249
        %v251 = vmul.u32 %v250, 2146121005
        %v252 = vshrl.u32 %v251, 15
        %v253 = vxor.u32 %v251, %v252
        %v254 = vmul.u32 %v253, 2221713035
        %v255 = vshrl.u32 %v254, 16
        %v256 = vxor.u32 %v254, %v255
        %v257 = vshrl.u32 %v256, 8
        %v258 = vshrl.u32 %v257, 16
        %v259 = vand.u32 %v257, 65535
        %v260 = vcvt.s32.f32 %v258
        %v261 = vmul.f32 %v260, 65536.0
        %v262 = vcvt.s32.f32 %v259
        %v263 = vadd.f32 %v261, %v262
        %v264 = vmul.f32 %v263, 5.9604645e-08
        %v265 = vld [vmem:[%s203] sm:$0xff]
        %v266 = vsub.f32 1.0, %v265
        %vm267 = vcmp.gt.f32.partialorder %v264, %v266
        %v268 = vsel %vm267, 1.0, 0.0
        %v269 = vld [vmem:[%s194] sm:$0xff]
        %v270 = vmul.f32 %v269, %v268
        %271 = vst [vmem:[%s228] sm:$0xff] %v270
        %v272 = vsub.f32 1.0, %v268
        %273 = vst [vmem:[%s235] sm:$0xff] %v272
        %s274 = sand.u32 %s89, 1
        %s275 = scalar_lea.sflag [#allocation6], %s274
        %s276 = sand.u32 %s89, 1
        %s277 = smul.addr %s276, 8
        %s278 = scalar_lea.vmem [#allocation9], %s277
        %s279 = sand.u32 %s115, 1
        %s280 = scalar_lea.sflag [#allocation11], %s279
        %s281 = sand.u32 %s115, 1
        %s282 = smul.addr %s281, 8
        %s283 = scalar_lea.vmem [#allocation10], %s282
        // Predicated region
        $region37: #{tpu_custom_call.1} parent=27 // pred_check
          %p284 = pneg %p99
        $region38: #{tpu_custom_call.1} parent=27 // pred_check_branch
          %286 = sbr.rel (%p284) target = $region40
        $region39: #{tpu_custom_call.1} parent=27 // pred_region
          %s288 = ssub.s32 128, 128
          %289 = vsyncadd %s275, %s288
          %s290 = smul.addr %s29, 128
          %s291 = scalar_lea.hbm %s3, %s290
          %s293 = sshll.u32 %s278, 4
          %s294 = int_to_ptr.vmem [resolvable:$true] %s293
          %296 = dma.vmem_to_hbm [thread:$0]  %s294, 128, %s291, %s275
        $region40: #{tpu_custom_call.1} parent=27 // pred_fallthru
          _
        // Predicated region
        $region41: #{tpu_custom_call.1} parent=27 // pred_check
          %p297 = pneg %p125
        $region42: #{tpu_custom_call.1} parent=27 // pred_check_branch
          %299 = sbr.rel (%p297) target = $region44
        $region43: #{tpu_custom_call.1} parent=27 // pred_region
          %s301 = ssub.s32 128, 128
          %302 = vsyncadd %s280, %s301
          %s303 = smul.addr %s29, 128
          %s304 = scalar_lea.hbm %s4, %s303
          %s306 = sshll.u32 %s283, 4
          %s307 = int_to_ptr.vmem [resolvable:$true] %s306
          %309 = dma.vmem_to_hbm [thread:$0]  %s307, 128, %s304, %s280
        $region44: #{tpu_custom_call.1} parent=27 // pred_fallthru
          _
      $region28: #{tpu_custom_call.1} parent=5 // pred_fallthru
        _
      %p310 = scmp.le.s32.totalorder 2, %s24
      // Predicated region
      $region45: #{tpu_custom_call.1} parent=5 // pred_check
        %p311 = pneg %p310
      $region46: #{tpu_custom_call.1} parent=5 // pred_check_branch
        %313 = sbr.rel (%p311) target = $region48
      $region47: #{tpu_custom_call.1} parent=5 // pred_region
        %s314 = ssub.s32 %s24, 2
        // Predicated region
        $region49: #{tpu_custom_call.1} parent=47 // pred_check
          %p315 = pneg %p105
        $region50: #{tpu_custom_call.1} parent=47 // pred_check_branch
          %317 = sbr.rel (%p315) target = $region52
        $region51: #{tpu_custom_call.1} parent=47 // pred_region
          %s318 = sand.u32 %s90, 1
          %s319 = scalar_lea.sflag [#allocation6], %s318
          %s320 = sand.u32 %s90, 1
          %s321 = smul.addr %s320, 8
          %s322 = scalar_lea.vmem [#allocation9], %s321
          %323 = dma.done %s319, 128
        $region52: #{tpu_custom_call.1} parent=47 // pred_fallthru
          _
        // Predicated region
        $region53: #{tpu_custom_call.1} parent=47 // pred_check
          %p324 = pneg %p131
        $region54: #{tpu_custom_call.1} parent=47 // pred_check_branch
          %326 = sbr.rel (%p324) target = $region56
        $region55: #{tpu_custom_call.1} parent=47 // pred_region
          %s327 = sand.u32 %s116, 1
          %s328 = scalar_lea.sflag [#allocation11], %s327
          %s329 = sand.u32 %s116, 1
          %s330 = smul.addr %s329, 8
          %s331 = scalar_lea.vmem [#allocation10], %s330
          %332 = dma.done %s328, 128
        $region56: #{tpu_custom_call.1} parent=47 // pred_fallthru
          _
      $region48: #{tpu_custom_call.1} parent=5 // pred_fallthru
        _
    $region6: #{tpu_custom_call.1} parent=1 // loop_footer
      %s28 = sadd.s32 1, %s24
    $region7: #{tpu_custom_call.1} parent=1 // loop_footer_branch
      %23 = sbr.rel target = $region3
    $region8: #{tpu_custom_call.1} parent=1 // loop_exit
      _
    %333 = vsyncpa [#allocation5], 1
    %s334 = scalar_lea.sflag [#allocation5], 1
    %335 = vsyncpa %s334, 1
    %336 = vsyncpa [#allocation8], 1
    %s337 = scalar_lea.sflag [#allocation8], 1
    %338 = vsyncpa %s337, 1
    %339 = vsyncpa [#allocation6], 1
    %s340 = scalar_lea.sflag [#allocation6], 1
    %341 = vsyncpa %s340, 1
    %342 = vsyncpa [#allocation11], 1
    %s343 = scalar_lea.sflag [#allocation11], 1
    %344 = vsyncpa %s343, 1

</llo_original>
